<compile_context>
chip_gen: v7x
topology: tpu7x:2x2x1
jax: 0.10.0
libtpu: 0.0.40
codegen_flags: <defaults>
</compile_context>

<pallas_src>
import functools

import jax
import jax.numpy as jnp
from jax import lax
from jax.experimental import pallas as pl
from jax.experimental.pallas import tpu as pltpu


def _round_up(x, m):
    return ((x + m - 1) // m) * m


_GELU_C = 1.5957691216057308  # 2 * sqrt(2 / pi)


def _gelu_f32(h):
    # TODO(synk): PyTorch nn.GELU() defaults to the exact erf GELU; this is the
    # tanh approximation rewritten in sigmoid form (0.5h(1+tanh z) == h*sigmoid(2z)),
    # max abs diff ~1e-3, chosen because it lowers cleanly (exp on EUP) everywhere.
    t = _GELU_C * (h + 0.044715 * (h * h * h))
    return h / (1.0 + jnp.exp(-t))


# ----------------------------------------------------------------------------
# Fused FeedForward kernel: o = GELU(x @ W1 + b1) @ W2 + b2
#   x_ref  : (tm, dim)        f32 row tile (cast to bf16 in-kernel)
#   w1_ref : (dim, hidden)    compute dtype, VMEM-resident, single-buffered
#   b1_ref : (1, hidden)      f32
#   w2_ref : (hidden, dim_p)  compute dtype, VMEM-resident, single-buffered
#   b2_ref : (1, dim_p)       f32  (zero-padded lanes beyond dim)
#   o_ref  : (tm, dim_p)      lane-dense output row tile (dim_p % 128 == 0)
#   acc_ref: (tm, dim_p)      f32 VMEM scratch accumulator (chunked path)
# ----------------------------------------------------------------------------
def _ffn_kernel(x_ref, w1_ref, b1_ref, w2_ref, b2_ref, o_ref, acc_ref, *,
                hidden_chunk, n_chunks, compute_dtype):
    xb = x_ref[...].astype(compute_dtype)

    if n_chunks == 1:
        # Small hidden: no chunking needed.
        h = jnp.dot(xb, w1_ref[...], preferred_element_type=jnp.float32)
        h = _gelu_f32(h + b1_ref[...])
        o = jnp.dot(h.astype(compute_dtype), w2_ref[...],
                    preferred_element_type=jnp.float32)
        o_ref[...] = (o + b2_ref[...]).astype(o_ref.dtype)
    else:
        # Chunk the hidden dim so only a (tm, hidden_chunk) f32 intermediate is
        # live at a time; accumulate the second matmul into VMEM scratch.
        acc_ref[...] = jnp.zeros_like(acc_ref)

        def body(c, carry):
            start = pl.multiple_of(c * hidden_chunk, hidden_chunk)
            h = jnp.dot(xb, w1_ref[:, pl.ds(start, hidden_chunk)],
                        preferred_element_type=jnp.float32)
            h = _gelu_f32(h + b1_ref[:, pl.ds(start, hidden_chunk)])
            acc_ref[...] += jnp.dot(h.astype(compute_dtype),
                                    w2_ref[pl.ds(start, hidden_chunk), :],
                                    preferred_element_type=jnp.float32)
            return carry

        lax.fori_loop(0, n_chunks, body, 0, unroll=True)
        o_ref[...] = (acc_ref[...] + b2_ref[...]).astype(o_ref.dtype)


def _pick_hidden_chunk(hidden):
    for c in (1024, 512, 256, 128):
        if hidden % c == 0:
            return c
    return hidden  # small / oddly-sized hidden -> single chunk


def prepare_params(params, *, compute_dtype=jnp.bfloat16):
    """One-time parameter preparation (do at load time, NOT per forward call):
    cast weights to the kernel compute dtype and zero-pad the output side of
    W2/b2 to a multiple of 128 lanes so output stores are lane-dense."""
    w1, b1, w2, b2 = params["w1"], params["b1"], params["w2"], params["b2"]
    dim, hidden = w1.shape
    assert w2.shape == (hidden, dim)
    dim_pad = _round_up(dim, 128)

    w2p = jnp.zeros((hidden, dim_pad), compute_dtype)
    w2p = w2p.at[:, :dim].set(w2.astype(compute_dtype))
    b2p = jnp.zeros((1, dim_pad), jnp.float32)
    b2p = b2p.at[:, :dim].set(b2.astype(jnp.float32)[None, :])

    return {
        "w1": w1.astype(compute_dtype),                   # (dim, hidden)
        "b1": b1.astype(jnp.float32).reshape(1, hidden),  # (1, hidden)
        "w2": w2p,                                        # (hidden, dim_pad)
        "b2": b2p,                                        # (1, dim_pad)
        "dim": dim, "hidden": hidden, "dim_pad": dim_pad,
        "compute_dtype": compute_dtype,
    }


def feedforward_forward(x, prepared, *, block_rows=512):
    """x: (b, n, dim) f32.  Dropout p=0.0 -> identity (inference semantics)."""
    b, n, dim = x.shape
    hidden = prepared["hidden"]
    dim_pad = prepared["dim_pad"]
    compute_dtype = prepared["compute_dtype"]
    assert prepared["dim"] == dim

    M = b * n
    x2d = x.reshape(M, dim)  # NO dtype cast here; the kernel casts in VMEM.

    # Row tile: multiple of 16 (bf16 sublane packing), 256-aligned when large
    # (256-wide MXU on v6e/v7x), and small enough that the grid has >=2 steps
    # when M allows it so both v7x TensorCores get work.
    tm = min(block_rows,
             _round_up(pl.cdiv(M, 2), 256),
             _round_up(M, 16))
    grid = (pl.cdiv(M, tm),)

    hidden_chunk = _pick_hidden_chunk(hidden)
    n_chunks = hidden // hidden_chunk

    # VMEM budget: x tile (f32 x2 bufs) + out tile (f32 x2) + single-buffered
    # weights + biases + f32 accumulator + one (tm, chunk) f32 intermediate,
    # with ~1.5x headroom. Capped at 64 MiB (v7x per-TC VMEM).
    wbytes = jnp.dtype(compute_dtype).itemsize
    est = (tm * dim * 4 * 2
           + tm * dim_pad * 4 * 2
           + (dim * hidden + hidden * dim_pad) * wbytes
           + (hidden + dim_pad) * 4
           + tm * dim_pad * 4
           + tm * hidden_chunk * 4 * 2)
    vmem_limit = int(min(max(est * 3 // 2 + (4 << 20), 32 << 20), 64 << 20))

    kernel = functools.partial(_ffn_kernel,
                               hidden_chunk=hidden_chunk,
                               n_chunks=n_chunks,
                               compute_dtype=compute_dtype)

    def run(single_buffer_weights):
        # Resident (constant index_map) operands: one buffer is enough.
        wkw = {"pipeline_mode": pl.Buffered(1)} if single_buffer_weights else {}
        return pl.pallas_call(
            kernel,
            out_shape=jax.ShapeDtypeStruct((M, dim_pad), x.dtype),
            grid_spec=pltpu.PrefetchScalarGridSpec(
                num_scalar_prefetch=0,
                grid=grid,
                in_specs=[
                    pl.BlockSpec((tm, dim), lambda i: (i, 0)),                  # x tile
                    pl.BlockSpec((dim, hidden), lambda i: (0, 0), **wkw),       # W1
                    pl.BlockSpec((1, hidden), lambda i: (0, 0), **wkw),         # b1
                    pl.BlockSpec((hidden, dim_pad), lambda i: (0, 0), **wkw),   # W2
                    pl.BlockSpec((1, dim_pad), lambda i: (0, 0), **wkw),        # b2
                ],
                out_specs=pl.BlockSpec((tm, dim_pad), lambda i: (i, 0)),
                scratch_shapes=[pltpu.VMEM((tm, dim_pad), jnp.float32)],
            ),
            compiler_params=pltpu.CompilerParams(
                dimension_semantics=("parallel",),   # shard rows across TCs (v7x)
                vmem_limit_bytes=vmem_limit,
            ),
        )(x2d, prepared["w1"], prepared["b1"], prepared["w2"], prepared["b2"])

    try:
        out2d = run(True)
    except Exception:
        # Fallback if this jax build rejects single-buffered resident inputs.
        out2d = run(False)

    if dim_pad != dim:
        out2d = out2d[:, :dim]
    return out2d.reshape(b, n, dim)


if __name__ == "__main__":
    # Small shapes consistent with the module: x is (batch, seq, dim)
    batch, seq, dim, hidden = 2, 8, 32, 64

    key = jax.random.PRNGKey(0)
    kx, k1, k2, k3, k4 = jax.random.split(key, 5)
    x = jax.random.normal(kx, (batch, seq, dim), dtype=jnp.float32)
    raw_params = {
        "w1": (0.02 * jax.random.normal(k1, (dim, hidden))).astype(jnp.float32),
        "b1": (0.02 * jax.random.normal(k2, (hidden,))).astype(jnp.float32),
        "w2": (0.02 * jax.random.normal(k3, (hidden, dim))).astype(jnp.float32),
        "b2": (0.02 * jax.random.normal(k4, (dim,))).astype(jnp.float32),
    }

    prepared = prepare_params(raw_params)          # one-time cast / pad
    out = feedforward_forward(x, prepared)
    jax.block_until_ready(out)

    # Pure-JAX reference with the same numerics contract (bf16 matmul operands,
    # f32 accumulation, sigmoid-form tanh GELU, fused bias, dropout p=0).
    def ref(xv):
        x2d = xv.reshape(batch * seq, dim).astype(jnp.bfloat16)
        h = jnp.dot(x2d, raw_params["w1"].astype(jnp.bfloat16),
                    preferred_element_type=jnp.float32) + raw_params["b1"][None, :]
        h = _gelu_f32(h)
        o = jnp.dot(h.astype(jnp.bfloat16), raw_params["w2"].astype(jnp.bfloat16),
                    preferred_element_type=jnp.float32) + raw_params["b2"][None, :]
        return o.astype(xv.dtype).reshape(batch, seq, dim)

    ref_out = ref(x)
    assert out.shape == (batch, seq, dim)
    assert jnp.allclose(out, ref_out, atol=2e-3, rtol=2e-3), "mismatch vs reference"

    print("KERNEL_OK")
</pallas_src>

<mosaic_0001>
module attributes {stable_mosaic.version = 11 : i64} {
  func.func @_ffn_kernel(%arg0: i32, %arg1: memref<16x32xf32, #tpu.memory_space<vmem>>, %arg2: memref<32x64xbf16, #tpu.memory_space<vmem>>, %arg3: memref<1x64xf32, #tpu.memory_space<vmem>>, %arg4: memref<64x128xbf16, #tpu.memory_space<vmem>>, %arg5: memref<1x128xf32, #tpu.memory_space<vmem>>, %arg6: memref<16x128xf32, #tpu.memory_space<vmem>>, %arg7: memref<16x128xf32, #tpu.memory_space<vmem>>) attributes {dimension_semantics = [#tpu.dimension_semantics<parallel>], iteration_bounds = array<i64: 1>, scalar_prefetch = 0 : i64, scratch_operands = 1 : i64, tpu.core_type = #tpu.core_type<tc>, window_params = [{transform_indices = @transform_0, window_bounds = array<i64: 16, 32>}, {pipeline_mode = #tpu.pipeline_mode<synchronous>, transform_indices = @transform_1, window_bounds = array<i64: 32, 64>}, {pipeline_mode = #tpu.pipeline_mode<synchronous>, transform_indices = @transform_2, window_bounds = array<i64: 1, 64>}, {pipeline_mode = #tpu.pipeline_mode<synchronous>, transform_indices = @transform_3, window_bounds = array<i64: 64, 128>}, {pipeline_mode = #tpu.pipeline_mode<synchronous>, transform_indices = @transform_4, window_bounds = array<i64: 1, 128>}, {transform_indices = @transform_5, window_bounds = array<i64: 16, 128>}]} {
    %c0 = arith.constant 0 : index
    %c0_0 = arith.constant 0 : index
    %0 = vector.load %arg1[%c0, %c0_0] : memref<16x32xf32, #tpu.memory_space<vmem>>, vector<16x32xf32>
    %1 = arith.truncf %0 : vector<16x32xf32> to vector<16x32xbf16>
    %c0_1 = arith.constant 0 : index
    %c0_2 = arith.constant 0 : index
    %2 = vector.load %arg2[%c0_1, %c0_2] : memref<32x64xbf16, #tpu.memory_space<vmem>>, vector<32x64xbf16>
    %cst = arith.constant dense<0.000000e+00> : vector<16x64xf32>
    %3 = tpu.matmul %1, %2, %cst {dimension_numbers = #tpu.dot_dimension_numbers<[1], [0], [0], [1], [0, 0, 1, 1], [], []>} : vector<16x32xbf16>, vector<32x64xbf16>, vector<16x64xf32> -> vector<16x64xf32>
    %c0_3 = arith.constant 0 : index
    %c0_4 = arith.constant 0 : index
    %4 = vector.load %arg3[%c0_3, %c0_4] : memref<1x64xf32, #tpu.memory_space<vmem>>, vector<1x64xf32>
    %5 = vector.broadcast %4 : vector<1x64xf32> to vector<16x64xf32>
    %6 = arith.addf %3, %5 : vector<16x64xf32>
    %7 = arith.mulf %6, %6 : vector<16x64xf32>
    %8 = arith.mulf %7, %6 : vector<16x64xf32>
    %cst_5 = arith.constant 4.471500e-02 : f32
    %9 = vector.broadcast %cst_5 : f32 to vector<16x64xf32>
    %10 = arith.mulf %9, %8 : vector<16x64xf32>
    %11 = arith.addf %6, %10 : vector<16x64xf32>
    %cst_6 = arith.constant 1.59576917 : f32
    %12 = vector.broadcast %cst_6 : f32 to vector<16x64xf32>
    %13 = arith.mulf %12, %11 : vector<16x64xf32>
    %cst_7 = arith.constant 0.000000e+00 : f32
    %14 = vector.broadcast %cst_7 : f32 to vector<16x64xf32>
    %15 = arith.subf %14, %13 : vector<16x64xf32>
    %16 = math.exp %15 : vector<16x64xf32>
    %cst_8 = arith.constant 1.000000e+00 : f32
    %17 = vector.broadcast %cst_8 : f32 to vector<16x64xf32>
    %18 = arith.addf %17, %16 : vector<16x64xf32>
    %19 = arith.divf %6, %18 : vector<16x64xf32>
    %20 = arith.truncf %19 : vector<16x64xf32> to vector<16x64xbf16>
    %c0_9 = arith.constant 0 : index
    %c0_10 = arith.constant 0 : index
    %21 = vector.load %arg4[%c0_9, %c0_10] : memref<64x128xbf16, #tpu.memory_space<vmem>>, vector<64x128xbf16>
    %cst_11 = arith.constant dense<0.000000e+00> : vector<16x128xf32>
    %22 = tpu.matmul %20, %21, %cst_11 {dimension_numbers = #tpu.dot_dimension_numbers<[1], [0], [0], [1], [0, 0, 1, 1], [], []>} : vector<16x64xbf16>, vector<64x128xbf16>, vector<16x128xf32> -> vector<16x128xf32>
    %c0_12 = arith.constant 0 : index
    %c0_13 = arith.constant 0 : index
    %23 = vector.load %arg5[%c0_12, %c0_13] : memref<1x128xf32, #tpu.memory_space<vmem>>, vector<1x128xf32>
    %24 = vector.broadcast %23 : vector<1x128xf32> to vector<16x128xf32>
    %25 = arith.addf %22, %24 : vector<16x128xf32>
    %c0_14 = arith.constant 0 : index
    %c0_15 = arith.constant 0 : index
    %26 = vector.load %arg6[%c0_14, %c0_15] : memref<16x128xf32, #tpu.memory_space<vmem>>, vector<16x128xf32>
    tpu.vector_store %arg6[%c0_14, %c0_15], %25 {strides = array<i32>} : memref<16x128xf32, #tpu.memory_space<vmem>>, vector<16x128xf32>,
    return
  }
  func.func @transform_0(%arg0: i32) -> (i32, i32) {
    %c0_i32 = arith.constant 0 : i32
    %c0_i32_0 = arith.constant 0 : i32
    return %arg0, %c0_i32 : i32, i32
  }
  func.func @transform_1(%arg0: i32) -> (i32, i32) {
    %c0_i32 = arith.constant 0 : i32
    %c0_i32_0 = arith.constant 0 : i32
    %c0_i32_1 = arith.constant 0 : i32
    return %c0_i32, %c0_i32_0 : i32, i32
  }
  func.func @transform_2(%arg0: i32) -> (i32, i32) {
    %c0_i32 = arith.constant 0 : i32
    %c0_i32_0 = arith.constant 0 : i32
    %c0_i32_1 = arith.constant 0 : i32
    return %c0_i32, %c0_i32_0 : i32, i32
  }
  func.func @transform_3(%arg0: i32) -> (i32, i32) {
    %c0_i32 = arith.constant 0 : i32
    %c0_i32_0 = arith.constant 0 : i32
    %c0_i32_1 = arith.constant 0 : i32
    return %c0_i32, %c0_i32_0 : i32, i32
  }
  func.func @transform_4(%arg0: i32) -> (i32, i32) {
    %c0_i32 = arith.constant 0 : i32
    %c0_i32_0 = arith.constant 0 : i32
    %c0_i32_1 = arith.constant 0 : i32
    return %c0_i32, %c0_i32_0 : i32, i32
  }
  func.func @transform_5(%arg0: i32) -> (i32, i32) {
    %c0_i32 = arith.constant 0 : i32
    %c0_i32_0 = arith.constant 0 : i32
    return %arg0, %c0_i32 : i32, i32
  }
}

module attributes {stable_mosaic.version = 11 : i64} {
  func.func @_ffn_kernel(%arg0: i32, %arg1: memref<16x32xf32, #tpu.memory_space<vmem>>, %arg2: memref<32x64xbf16, #tpu.memory_space<vmem>>, %arg3: memref<1x64xf32, #tpu.memory_space<vmem>>, %arg4: memref<64x128xbf16, #tpu.memory_space<vmem>>, %arg5: memref<1x128xf32, #tpu.memory_space<vmem>>, %arg6: memref<16x128xf32, #tpu.memory_space<vmem>>, %arg7: memref<16x128xf32, #tpu.memory_space<vmem>>) attributes {dimension_semantics = [#tpu.dimension_semantics<parallel>], iteration_bounds = array<i64: 1>, scalar_prefetch = 0 : i64, scratch_operands = 1 : i64, tpu.core_type = #tpu.core_type<tc>, window_params = [{transform_indices = @transform_0, window_bounds = array<i64: 16, 32>}, {pipeline_mode = #tpu.pipeline_mode<synchronous>, transform_indices = @transform_1, window_bounds = array<i64: 32, 64>}, {pipeline_mode = #tpu.pipeline_mode<synchronous>, transform_indices = @transform_2, window_bounds = array<i64: 1, 64>}, {pipeline_mode = #tpu.pipeline_mode<synchronous>, transform_indices = @transform_3, window_bounds = array<i64: 64, 128>}, {pipeline_mode = #tpu.pipeline_mode<synchronous>, transform_indices = @transform_4, window_bounds = array<i64: 1, 128>}, {transform_indices = @transform_5, window_bounds = array<i64: 16, 128>}]} {
    %c0 = arith.constant 0 : index
    %c0_0 = arith.constant 0 : index
    %0 = vector.load %arg1[%c0, %c0_0] : memref<16x32xf32, #tpu.memory_space<vmem>>, vector<16x32xf32>
    %1 = arith.truncf %0 : vector<16x32xf32> to vector<16x32xbf16>
    %c0_1 = arith.constant 0 : index
    %c0_2 = arith.constant 0 : index
    %2 = vector.load %arg2[%c0_1, %c0_2] : memref<32x64xbf16, #tpu.memory_space<vmem>>, vector<32x64xbf16>
    %cst = arith.constant dense<0.000000e+00> : vector<16x64xf32>
    %3 = tpu.matmul %1, %2, %cst {dimension_numbers = #tpu.dot_dimension_numbers<[1], [0], [0], [1], [0, 0, 1, 1], [], []>} : vector<16x32xbf16>, vector<32x64xbf16>, vector<16x64xf32> -> vector<16x64xf32>
    %c0_3 = arith.constant 0 : index
    %c0_4 = arith.constant 0 : index
    %4 = vector.load %arg3[%c0_3, %c0_4] : memref<1x64xf32, #tpu.memory_space<vmem>>, vector<1x64xf32>
    %5 = vector.broadcast %4 : vector<1x64xf32> to vector<16x64xf32>
    %6 = arith.addf %3, %5 : vector<16x64xf32>
    %7 = arith.mulf %6, %6 : vector<16x64xf32>
    %8 = arith.mulf %7, %6 : vector<16x64xf32>
    %cst_5 = arith.constant 4.471500e-02 : f32
    %9 = vector.broadcast %cst_5 : f32 to vector<16x64xf32>
    %10 = arith.mulf %9, %8 : vector<16x64xf32>
    %11 = arith.addf %6, %10 : vector<16x64xf32>
    %cst_6 = arith.constant 1.59576917 : f32
    %12 = vector.broadcast %cst_6 : f32 to vector<16x64xf32>
    %13 = arith.mulf %12, %11 : vector<16x64xf32>
    %cst_7 = arith.constant 0.000000e+00 : f32
    %14 = vector.broadcast %cst_7 : f32 to vector<16x64xf32>
    %15 = arith.subf %14, %13 : vector<16x64xf32>
    %16 = math.exp %15 : vector<16x64xf32>
    %cst_8 = arith.constant 1.000000e+00 : f32
    %17 = vector.broadcast %cst_8 : f32 to vector<16x64xf32>
    %18 = arith.addf %17, %16 : vector<16x64xf32>
    %19 = arith.divf %6, %18 : vector<16x64xf32>
    %20 = arith.truncf %19 : vector<16x64xf32> to vector<16x64xbf16>
    %c0_9 = arith.constant 0 : index
    %c0_10 = arith.constant 0 : index
    %21 = vector.load %arg4[%c0_9, %c0_10] : memref<64x128xbf16, #tpu.memory_space<vmem>>, vector<64x128xbf16>
    %cst_11 = arith.constant dense<0.000000e+00> : vector<16x128xf32>
    %22 = tpu.matmul %20, %21, %cst_11 {dimension_numbers = #tpu.dot_dimension_numbers<[1], [0], [0], [1], [0, 0, 1, 1], [], []>} : vector<16x64xbf16>, vector<64x128xbf16>, vector<16x128xf32> -> vector<16x128xf32>
    %c0_12 = arith.constant 0 : index
    %c0_13 = arith.constant 0 : index
    %23 = vector.load %arg5[%c0_12, %c0_13] : memref<1x128xf32, #tpu.memory_space<vmem>>, vector<1x128xf32>
    %24 = vector.broadcast %23 : vector<1x128xf32> to vector<16x128xf32>
    %25 = arith.addf %22, %24 : vector<16x128xf32>
    %c0_14 = arith.constant 0 : index
    %c0_15 = arith.constant 0 : index
    %26 = vector.load %arg6[%c0_14, %c0_15] : memref<16x128xf32, #tpu.memory_space<vmem>>, vector<16x128xf32>
    tpu.vector_store %arg6[%c0_14, %c0_15], %25 {strides = array<i32>} : memref<16x128xf32, #tpu.memory_space<vmem>>, vector<16x128xf32>,
    return
  }
  func.func @transform_0(%arg0: i32) -> (i32, i32) {
    %c0_i32 = arith.constant 0 : i32
    %c0_i32_0 = arith.constant 0 : i32
    return %arg0, %c0_i32 : i32, i32
  }
  func.func @transform_1(%arg0: i32) -> (i32, i32) {
    %c0_i32 = arith.constant 0 : i32
    %c0_i32_0 = arith.constant 0 : i32
    %c0_i32_1 = arith.constant 0 : i32
    return %c0_i32, %c0_i32_0 : i32, i32
  }
  func.func @transform_2(%arg0: i32) -> (i32, i32) {
    %c0_i32 = arith.constant 0 : i32
    %c0_i32_0 = arith.constant 0 : i32
    %c0_i32_1 = arith.constant 0 : i32
    return %c0_i32, %c0_i32_0 : i32, i32
  }
  func.func @transform_3(%arg0: i32) -> (i32, i32) {
    %c0_i32 = arith.constant 0 : i32
    %c0_i32_0 = arith.constant 0 : i32
    %c0_i32_1 = arith.constant 0 : i32
    return %c0_i32, %c0_i32_0 : i32, i32
  }
  func.func @transform_4(%arg0: i32) -> (i32, i32) {
    %c0_i32 = arith.constant 0 : i32
    %c0_i32_0 = arith.constant 0 : i32
    %c0_i32_1 = arith.constant 0 : i32
    return %c0_i32, %c0_i32_0 : i32, i32
  }
  func.func @transform_5(%arg0: i32) -> (i32, i32) {
    %c0_i32 = arith.constant 0 : i32
    %c0_i32_0 = arith.constant 0 : i32
    return %arg0, %c0_i32 : i32, i32
  }
}

</mosaic_0001>

<llo_original>
// kernel: tpu_custom_call.1
$region0: #{tpu_custom_call.1}
  #allocation0 [shape = 'u32[]', space=smem, size = 0x4, offset = 0x4, fixed_abs, tag = 'smem constant byte address 0x4 - core index']
  #allocation1 [shape = 'u32[144,128]{1,0:T(1,128)}', space=vmem, size = 0x12000, scoped, tag = 'internal scratch']
  #allocation2 [shape = 'f32[16,128]{1,0:T(8,128)}', space=vmem, size = 0x2000, scoped, tag = 'scratch operand']
  %s0 = inlined_call_operand.hbm [shape: f32[16,32], index: 0, kind: input, shape index: {}]
  %s1 = inlined_call_operand.hbm [shape: bf16[32,64], index: 1, kind: input, shape index: {}]
  %s2 = inlined_call_operand.vmem [shape: f32[1,64], index: 2, kind: input, shape index: {}]
  %s3 = inlined_call_operand.hbm [shape: bf16[64,128], index: 3, kind: input, shape index: {}]
  %s4 = inlined_call_operand.vmem [shape: f32[1,128], index: 4, kind: input, shape index: {}]
  %s5 = inlined_call_operand.hbm [shape: f32[16,128], index: 5, kind: output, shape index: {}]
  %s6 = sld [smem:[#allocation0]]
  $region42: #{tpu_custom_call.1} parent=0
    _
  %s8 = ssub.s32 1, %s6
  %s9 = scalar_select 0, %s8, %s6
  $region1: #{tpu_custom_call.1} parent=0
    #allocation3 [shape = 'u8[8192]{0}', space=vmem, size = 0x2000, scoped, tag = 'input window, operand 0, single buffered']
    #allocation4 [shape = 's32[1]{0}', space=sflag, size = 0x4, scoped, tag = 'scoped memory for tpu_custom_call.1']
    #allocation5 [shape = 's32[1]{0}', space=sflag, size = 0x4, scoped, tag = 'scoped memory for tpu_custom_call.1']
    #allocation6 [shape = 'u8[8192]{0}', space=vmem, size = 0x2000, scoped, tag = 'input window, operand 1, single buffered']
    #allocation7 [shape = 's32[1]{0}', space=sflag, size = 0x4, scoped, tag = 'scoped memory for tpu_custom_call.1']
    #allocation8 [shape = 'u8[16384]{0}', space=vmem, size = 0x4000, scoped, tag = 'input window, operand 3, single buffered']
    #allocation9 [shape = 'u8[8192]{0}', space=vmem, size = 0x2000, scoped, tag = 'output window, operand 0, single buffered']
    %10 = vsyncpa [#allocation4], 0
    %11 = vsyncpa [#allocation7], 0
    %12 = vsyncpa [#allocation5], 0
    // Predicated region
    $region2: #{tpu_custom_call.1} parent=1 // pred_check
      _
    $region3: #{tpu_custom_call.1} parent=1 // pred_check_branch
      %14 = sbr.rel (0) target = $region5
    $region4: #{tpu_custom_call.1} parent=1 // pred_region
      %s16 = ssub.s32 256, 256
      %17 = vsyncadd [#allocation4], %s16
      %s18 = sshll.u32 [#allocation3], 4
      %s19 = int_to_ptr.vmem [resolvable:$true] %s18
      %24 = dma.hbm_to_vmem [thread:$0]  %s0, 256, %s19, [#allocation4], 128, 128, 8
    $region5: #{tpu_custom_call.1} parent=1 // pred_fallthru
      _
    // Predicated region
    $region6: #{tpu_custom_call.1} parent=1 // pred_check
      _
    $region7: #{tpu_custom_call.1} parent=1 // pred_check_branch
      %26 = sbr.rel (0) target = $region9
    $region8: #{tpu_custom_call.1} parent=1 // pred_region
      %s28 = ssub.s32 256, 256
      %29 = vsyncadd [#allocation7], %s28
      %s30 = sshll.u32 [#allocation6], 4
      %s31 = int_to_ptr.vmem [resolvable:$true] %s30
      %36 = dma.hbm_to_vmem [thread:$0]  %s1, 256, %s31, [#allocation7], 64, 64, 4
    $region9: #{tpu_custom_call.1} parent=1 // pred_fallthru
      _
    // Predicated region
    $region10: #{tpu_custom_call.1} parent=1 // pred_check
      _
    $region11: #{tpu_custom_call.1} parent=1 // pred_check_branch
      %38 = sbr.rel (0) target = $region13
    $region12: #{tpu_custom_call.1} parent=1 // pred_region
      _
    $region13: #{tpu_custom_call.1} parent=1 // pred_fallthru
      _
    // Predicated region
    $region14: #{tpu_custom_call.1} parent=1 // pred_check
      _
    $region15: #{tpu_custom_call.1} parent=1 // pred_check_branch
      %40 = sbr.rel (0) target = $region17
    $region16: #{tpu_custom_call.1} parent=1 // pred_region
      %s42 = ssub.s32 512, 512
      %43 = vsyncadd [#allocation7], %s42
      %s44 = sshll.u32 [#allocation8], 4
      %s45 = int_to_ptr.vmem [resolvable:$true] %s44
      %50 = dma.hbm_to_vmem [thread:$0]  %s3, 512, %s45, [#allocation7], 64, 64, 4
    $region17: #{tpu_custom_call.1} parent=1 // pred_fallthru
      _
    // Predicated region
    $region18: #{tpu_custom_call.1} parent=1 // pred_check
      _
    $region19: #{tpu_custom_call.1} parent=1 // pred_check_branch
      %52 = sbr.rel (0) target = $region21
    $region20: #{tpu_custom_call.1} parent=1 // pred_region
      _
    $region21: #{tpu_custom_call.1} parent=1 // pred_fallthru
      _
    // Predicated region
    $region22: #{tpu_custom_call.1} parent=1 // pred_check
      _
    $region23: #{tpu_custom_call.1} parent=1 // pred_check_branch
      %54 = sbr.rel (0) target = $region25
    $region24: #{tpu_custom_call.1} parent=1 // pred_region
      %55 = dma.done [#allocation4], 256
    $region25: #{tpu_custom_call.1} parent=1 // pred_fallthru
      _
    // Predicated region
    $region26: #{tpu_custom_call.1} parent=1 // pred_check
      _
    $region27: #{tpu_custom_call.1} parent=1 // pred_check_branch
      %57 = sbr.rel (0) target = $region29
    $region28: #{tpu_custom_call.1} parent=1 // pred_region
      %58 = dma.done [#allocation7], 256
    $region29: #{tpu_custom_call.1} parent=1 // pred_fallthru
      _
    // Predicated region
    $region30: #{tpu_custom_call.1} parent=1 // pred_check
      _
    $region31: #{tpu_custom_call.1} parent=1 // pred_check_branch
      %60 = sbr.rel (0) target = $region33
    $region32: #{tpu_custom_call.1} parent=1 // pred_region
      %61 = dma.done [#allocation7], 512
    $region33: #{tpu_custom_call.1} parent=1 // pred_fallthru
      _
    %v63 = vld [vmem:[#allocation3] sm:$0xff]
    %v64 = vld [vmem:[#allocation3 + $0x8] sm:$0xff]
    %v65 = vpack.c.bf16 %v64, %v63
    %v66 = vld [vmem:[#allocation6] sm:$0xf]
    %v67 = vld [vmem:[#allocation6 + $0x4] sm:$0xf]
    %v68 = vld [vmem:[#allocation6 + $0x8] sm:$0xf]
    %v69 = vld [vmem:[#allocation6 + $0xc] sm:$0xf]
    %v70 = vld [vmem:[%s2] sm:$0x1]
    %v72 = vlaneseq
    %v73 = vshrl.u32 %v72, 7
    %v74 = vsub.s32 0, %v73
    %v75 = vrot.slane %v70, %v74
    %v81 = vunpack.c.l.b16 %v66
    %v82 = vunpack.c.l.b16 %v67
    %v83 = vunpack.c.l.b16 %v68
    %v84 = vunpack.c.l.b16 %v69
    %v85 = vpack.c.b16 %v82, %v81
    %v86 = vpack.c.b16 %v84, %v83
    %vm89 = vcmask 261120
    %v91 = vsel %vm89, %v65, 0
    %93 = vmatprep.subr.bf16.mxu0 0
    %94 = vmatpush1.bf16.msra.mxu0 %v85
    %95 = vmatprep.subr.bf16.mxu0 0
    %96 = vmatpush1.bf16.msra.mxu0 %v86
    %97 = vmatprep.subr.bf16.mxu0 0
    %98 = vmatpush1.bf16.msra.mxu0 0
    %99 = vmatprep.subr.bf16.mxu0 0
    %100 = vmatpush1.bf16.msra.mxu0 0
    %101 = vmatprep.subr.bf16.mxu0 0
    %102 = vmatpush1.bf16.msra.mxu0 0
    %103 = vmatprep.subr.bf16.mxu0 0
    %104 = vmatpush1.bf16.msra.mxu0 0
    %105 = vmatprep.subr.bf16.mxu0 0
    %106 = vmatpush1.bf16.msra.mxu0 0
    %107 = vmatprep.subr.bf16.mxu0 0
    %108 = vmatpush1.bf16.msra.mxu0 0
    %109 = vmatprep.subr.bf16.mxu0 0
    %110 = vmatpush1.bf16.msra.mxu0 0
    %111 = vmatprep.subr.bf16.mxu0 0
    %112 = vmatpush1.bf16.msra.mxu0 0
    %113 = vmatprep.subr.bf16.mxu0 0
    %114 = vmatpush1.bf16.msra.mxu0 0
    %115 = vmatprep.subr.bf16.mxu0 0
    %116 = vmatpush1.bf16.msra.mxu0 0
    %117 = vmatprep.subr.bf16.mxu0 0
    %118 = vmatpush1.bf16.msra.mxu0 0
    %119 = vmatprep.subr.bf16.mxu0 0
    %120 = vmatpush1.bf16.msra.mxu0 0
    %121 = vmatprep.subr.bf16.mxu0 0
    %122 = vmatpush1.bf16.msra.mxu0 0
    %123 = vmatprep.subr.bf16.mxu0 0
    %124 = vmatpush1.bf16.msra.mxu0 0
    %125 = vmatprep.mubr.bf16.mxu0 0
    %126 = vmatmul.mubr.bf16.gmra.mrb[0].mxu0 %v91
    %v127 = vpop.f32.mrb[0].mxu0
    %v128 = vadd.f32 %v75, %v127
    %v129 = vpop.f32.mrb[0].mxu0
    %v130 = vpop.f32.mrb[0].mxu0
    %v131 = vadd.f32 %v75, %v130
    %v132 = vpop.f32.mrb[0].mxu0
    %133 = vdwg.mxu0
    %v134 = vmul.f32 %v128, %v128
    %v135 = vmul.f32 %v131, %v131
    %v136 = vmul.f32 %v134, %v128
    %v137 = vmul.f32 %v135, %v131
    %v138 = vmul.f32 %v136, 0.044715
    %v139 = vmul.f32 %v137, 0.044715
    %v140 = vadd.f32 %v128, %v138
    %v141 = vadd.f32 %v131, %v139
    %v142 = vmul.f32 %v140, 1.5957692
    %v143 = vmul.f32 %v141, 1.5957692
    %v144 = vsub.f32 0.0, %v142
    %v145 = vsub.f32 0.0, %v143
    %v146 = vmul.f32 %v144, 1.442695
    %v147 = vpow.pop %v146
    %v148 = vmul.f32 %v145, 1.442695
    %v149 = vpow.pop %v148
    %v150 = vadd.f32 %v147, 1.0
    %v151 = vadd.f32 %v149, 1.0
    %v152 = vrcp.pop %v150
    %v153 = vmul.f32 %v128, %v152
    %v154 = vrcp.pop %v151
    %v155 = vmul.f32 %v131, %v154
    %v156 = vpack.c.bf16 %v155, %v153
    %v157 = vld [vmem:[#allocation8] sm:$0xf]
    %v158 = vld [vmem:[#allocation8 + $0x4] sm:$0xf]
    %v159 = vld [vmem:[#allocation8 + $0x8] sm:$0xf]
    %v160 = vld [vmem:[#allocation8 + $0xc] sm:$0xf]
    %v161 = vld [vmem:[#allocation8 + $0x10] sm:$0xf]
    %v162 = vld [vmem:[#allocation8 + $0x14] sm:$0xf]
    %v163 = vld [vmem:[#allocation8 + $0x18] sm:$0xf]
    %v164 = vld [vmem:[#allocation8 + $0x1c] sm:$0xf]
    %v165 = vld [vmem:[%s4] sm:$0x1]
    %v167 = vlaneseq
    %v168 = vshrl.u32 %v167, 7
    %v169 = vsub.s32 0, %v168
    %v170 = vrot.slane %v165, %v169
    %v180 = vunpack.c.l.b16 %v157
    %v181 = vunpack.c.l.b16 %v158
    %v182 = vunpack.c.l.b16 %v159
    %v183 = vunpack.c.l.b16 %v160
    %v184 = vunpack.c.l.b16 %v161
    %v185 = vunpack.c.l.b16 %v162
    %v186 = vunpack.c.l.b16 %v163
    %v187 = vunpack.c.l.b16 %v164
    %v188 = vpack.c.b16 %v181, %v180
    %v189 = vpack.c.b16 %v183, %v182
    %v190 = vpack.c.b16 %v185, %v184
    %v191 = vpack.c.b16 %v187, %v186
    %vm196 = vcmask 523264
    %v198 = vsel %vm196, %v156, 0
    %200 = vmatprep.subr.bf16.mxu0 0
    %201 = vmatpush1.bf16.msra.mxu0 %v188
    %202 = vmatprep.subr.bf16.mxu0 0
    %203 = vmatpush1.bf16.msra.mxu0 %v189
    %204 = vmatprep.subr.bf16.mxu0 0
    %205 = vmatpush1.bf16.msra.mxu0 %v190
    %206 = vmatprep.subr.bf16.mxu0 0
    %207 = vmatpush1.bf16.msra.mxu0 %v191
    %208 = vmatprep.subr.bf16.mxu0 0
    %209 = vmatpush1.bf16.msra.mxu0 0
    %210 = vmatprep.subr.bf16.mxu0 0
    %211 = vmatpush1.bf16.msra.mxu0 0
    %212 = vmatprep.subr.bf16.mxu0 0
    %213 = vmatpush1.bf16.msra.mxu0 0
    %214 = vmatprep.subr.bf16.mxu0 0
    %215 = vmatpush1.bf16.msra.mxu0 0
    %216 = vmatprep.subr.bf16.mxu0 0
    %217 = vmatpush1.bf16.msra.mxu0 0
    %218 = vmatprep.subr.bf16.mxu0 0
    %219 = vmatpush1.bf16.msra.mxu0 0
    %220 = vmatprep.subr.bf16.mxu0 0
    %221 = vmatpush1.bf16.msra.mxu0 0
    %222 = vmatprep.subr.bf16.mxu0 0
    %223 = vmatpush1.bf16.msra.mxu0 0
    %224 = vmatprep.subr.bf16.mxu0 0
    %225 = vmatpush1.bf16.msra.mxu0 0
    %226 = vmatprep.subr.bf16.mxu0 0
    %227 = vmatpush1.bf16.msra.mxu0 0
    %228 = vmatprep.subr.bf16.mxu0 0
    %229 = vmatpush1.bf16.msra.mxu0 0
    %230 = vmatprep.subr.bf16.mxu0 0
    %231 = vmatpush1.bf16.msra.mxu0 0
    %232 = vmatprep.mubr.bf16.mxu0 0
    %233 = vmatmul.mubr.bf16.gmra.mrb[0].mxu0 %v198
    %v234 = vpop.f32.mrb[0].mxu0
    %v235 = vadd.f32 %v170, %v234
    %v236 = vpop.f32.mrb[0].mxu0
    %v237 = vpop.f32.mrb[0].mxu0
    %v238 = vadd.f32 %v170, %v237
    %v239 = vpop.f32.mrb[0].mxu0
    %240 = vdwg.mxu0
    %241 = vst [vmem:[#allocation9] sm:$0xff] %v235
    %242 = vst [vmem:[#allocation9 + $0x8] sm:$0xff] %v238
    // Predicated region
    $region34: #{tpu_custom_call.1} parent=1 // pred_check
      _
    $region35: #{tpu_custom_call.1} parent=1 // pred_check_branch
      %244 = sbr.rel (0) target = $region37
    $region36: #{tpu_custom_call.1} parent=1 // pred_region
      %s246 = ssub.s32 256, 256
      %247 = vsyncadd [#allocation5], %s246
      %s248 = sshll.u32 [#allocation9], 4
      %s249 = int_to_ptr.vmem [resolvable:$true] %s248
      %254 = dma.vmem_to_hbm [thread:$0]  %s249, 256, %s5, [#allocation5], 128, 128, 8
    $region37: #{tpu_custom_call.1} parent=1 // pred_fallthru
      _
    // Predicated region
    $region38: #{tpu_custom_call.1} parent=1 // pred_check
      _
    $region39: #{tpu_custom_call.1} parent=1 // pred_check_branch
      %256 = sbr.rel (0) target = $region41
    $region40: #{tpu_custom_call.1} parent=1 // pred_region
      %257 = dma.done [#allocation5], 256
    $region41: #{tpu_custom_call.1} parent=1 // pred_fallthru
      _
    %258 = vsyncpa [#allocation4], 1
    %259 = vsyncpa [#allocation7], 1
    %260 = vsyncpa [#allocation5], 1

// kernel: tpu_custom_call.1
$region0: #{tpu_custom_call.1}
  #allocation0 [shape = 'u32[]', space=smem, size = 0x4, offset = 0x4, fixed_abs, tag = 'smem constant byte address 0x4 - core index']
  #allocation1 [shape = 'u32[144,128]{1,0:T(1,128)}', space=vmem, size = 0x12000, scoped, tag = 'internal scratch']
  #allocation2 [shape = 'f32[16,128]{1,0:T(8,128)}', space=vmem, size = 0x2000, scoped, tag = 'scratch operand']
  %s0 = inlined_call_operand.hbm [shape: f32[16,32], index: 0, kind: input, shape index: {}]
  %s1 = inlined_call_operand.hbm [shape: bf16[32,64], index: 1, kind: input, shape index: {}]
  %s2 = inlined_call_operand.vmem [shape: f32[1,64], index: 2, kind: input, shape index: {}]
  %s3 = inlined_call_operand.hbm [shape: bf16[64,128], index: 3, kind: input, shape index: {}]
  %s4 = inlined_call_operand.vmem [shape: f32[1,128], index: 4, kind: input, shape index: {}]
  %s5 = inlined_call_operand.hbm [shape: f32[16,128], index: 5, kind: output, shape index: {}]
  %s6 = sld [smem:[#allocation0]]
  $region42: #{tpu_custom_call.1} parent=0
    _
  %s8 = ssub.s32 1, %s6
  %s9 = scalar_select 0, %s8, %s6
  $region1: #{tpu_custom_call.1} parent=0
    #allocation3 [shape = 'u8[8192]{0}', space=vmem, size = 0x2000, scoped, tag = 'input window, operand 0, single buffered']
    #allocation4 [shape = 's32[1]{0}', space=sflag, size = 0x4, scoped, tag = 'scoped memory for tpu_custom_call.1']
    #allocation5 [shape = 's32[1]{0}', space=sflag, size = 0x4, scoped, tag = 'scoped memory for tpu_custom_call.1']
    #allocation6 [shape = 'u8[8192]{0}', space=vmem, size = 0x2000, scoped, tag = 'input window, operand 1, single buffered']
    #allocation7 [shape = 's32[1]{0}', space=sflag, size = 0x4, scoped, tag = 'scoped memory for tpu_custom_call.1']
    #allocation8 [shape = 'u8[16384]{0}', space=vmem, size = 0x4000, scoped, tag = 'input window, operand 3, single buffered']
    #allocation9 [shape = 'u8[8192]{0}', space=vmem, size = 0x2000, scoped, tag = 'output window, operand 0, single buffered']
    %10 = vsyncpa [#allocation4], 0
    %11 = vsyncpa [#allocation7], 0
    %12 = vsyncpa [#allocation5], 0
    // Predicated region
    $region2: #{tpu_custom_call.1} parent=1 // pred_check
      _
    $region3: #{tpu_custom_call.1} parent=1 // pred_check_branch
      %14 = sbr.rel (0) target = $region5
    $region4: #{tpu_custom_call.1} parent=1 // pred_region
      %s16 = ssub.s32 256, 256
      %17 = vsyncadd [#allocation4], %s16
      %s18 = sshll.u32 [#allocation3], 4
      %s19 = int_to_ptr.vmem [resolvable:$true] %s18
      %24 = dma.hbm_to_vmem [thread:$0]  %s0, 256, %s19, [#allocation4], 128, 128, 8
    $region5: #{tpu_custom_call.1} parent=1 // pred_fallthru
      _
    // Predicated region
    $region6: #{tpu_custom_call.1} parent=1 // pred_check
      _
    $region7: #{tpu_custom_call.1} parent=1 // pred_check_branch
      %26 = sbr.rel (0) target = $region9
    $region8: #{tpu_custom_call.1} parent=1 // pred_region
      %s28 = ssub.s32 256, 256
      %29 = vsyncadd [#allocation7], %s28
      %s30 = sshll.u32 [#allocation6], 4
      %s31 = int_to_ptr.vmem [resolvable:$true] %s30
      %36 = dma.hbm_to_vmem [thread:$0]  %s1, 256, %s31, [#allocation7], 64, 64, 4
    $region9: #{tpu_custom_call.1} parent=1 // pred_fallthru
      _
    // Predicated region
    $region10: #{tpu_custom_call.1} parent=1 // pred_check
      _
    $region11: #{tpu_custom_call.1} parent=1 // pred_check_branch
      %38 = sbr.rel (0) target = $region13
    $region12: #{tpu_custom_call.1} parent=1 // pred_region
      _
    $region13: #{tpu_custom_call.1} parent=1 // pred_fallthru
      _
    // Predicated region
    $region14: #{tpu_custom_call.1} parent=1 // pred_check
      _
    $region15: #{tpu_custom_call.1} parent=1 // pred_check_branch
      %40 = sbr.rel (0) target = $region17
    $region16: #{tpu_custom_call.1} parent=1 // pred_region
      %s42 = ssub.s32 512, 512
      %43 = vsyncadd [#allocation7], %s42
      %s44 = sshll.u32 [#allocation8], 4
      %s45 = int_to_ptr.vmem [resolvable:$true] %s44
      %50 = dma.hbm_to_vmem [thread:$0]  %s3, 512, %s45, [#allocation7], 64, 64, 4
    $region17: #{tpu_custom_call.1} parent=1 // pred_fallthru
      _
    // Predicated region
    $region18: #{tpu_custom_call.1} parent=1 // pred_check
      _
    $region19: #{tpu_custom_call.1} parent=1 // pred_check_branch
      %52 = sbr.rel (0) target = $region21
    $region20: #{tpu_custom_call.1} parent=1 // pred_region
      _
    $region21: #{tpu_custom_call.1} parent=1 // pred_fallthru
      _
    // Predicated region
    $region22: #{tpu_custom_call.1} parent=1 // pred_check
      _
    $region23: #{tpu_custom_call.1} parent=1 // pred_check_branch
      %54 = sbr.rel (0) target = $region25
    $region24: #{tpu_custom_call.1} parent=1 // pred_region
      %55 = dma.done [#allocation4], 256
    $region25: #{tpu_custom_call.1} parent=1 // pred_fallthru
      _
    // Predicated region
    $region26: #{tpu_custom_call.1} parent=1 // pred_check
      _
    $region27: #{tpu_custom_call.1} parent=1 // pred_check_branch
      %57 = sbr.rel (0) target = $region29
    $region28: #{tpu_custom_call.1} parent=1 // pred_region
      %58 = dma.done [#allocation7], 256
    $region29: #{tpu_custom_call.1} parent=1 // pred_fallthru
      _
    // Predicated region
    $region30: #{tpu_custom_call.1} parent=1 // pred_check
      _
    $region31: #{tpu_custom_call.1} parent=1 // pred_check_branch
      %60 = sbr.rel (0) target = $region33
    $region32: #{tpu_custom_call.1} parent=1 // pred_region
      %61 = dma.done [#allocation7], 512
    $region33: #{tpu_custom_call.1} parent=1 // pred_fallthru
      _
    %v63 = vld [vmem:[#allocation3] sm:$0xff]
    %v64 = vld [vmem:[#allocation3 + $0x8] sm:$0xff]
    %v65 = vpack.c.bf16 %v64, %v63
    %v66 = vld [vmem:[#allocation6] sm:$0xf]
    %v67 = vld [vmem:[#allocation6 + $0x4] sm:$0xf]
    %v68 = vld [vmem:[#allocation6 + $0x8] sm:$0xf]
    %v69 = vld [vmem:[#allocation6 + $0xc] sm:$0xf]
    %v70 = vld [vmem:[%s2] sm:$0x1]
    %v72 = vlaneseq
    %v73 = vshrl.u32 %v72, 7
    %v74 = vsub.s32 0, %v73
    %v75 = vrot.slane %v70, %v74
    %v81 = vunpack.c.l.b16 %v66
    %v82 = vunpack.c.l.b16 %v67
    %v83 = vunpack.c.l.b16 %v68
    %v84 = vunpack.c.l.b16 %v69
    %v85 = vpack.c.b16 %v82, %v81
    %v86 = vpack.c.b16 %v84, %v83
    %vm89 = vcmask 261120
    %v91 = vsel %vm89, %v65, 0
    %93 = vmatprep.subr.bf16.mxu0 0
    %94 = vmatpush1.bf16.msra.mxu0 %v85
    %95 = vmatprep.subr.bf16.mxu0 0
    %96 = vmatpush1.bf16.msra.mxu0 %v86
    %97 = vmatprep.subr.bf16.mxu0 0
    %98 = vmatpush1.bf16.msra.mxu0 0
    %99 = vmatprep.subr.bf16.mxu0 0
    %100 = vmatpush1.bf16.msra.mxu0 0
    %101 = vmatprep.subr.bf16.mxu0 0
    %102 = vmatpush1.bf16.msra.mxu0 0
    %103 = vmatprep.subr.bf16.mxu0 0
    %104 = vmatpush1.bf16.msra.mxu0 0
    %105 = vmatprep.subr.bf16.mxu0 0
    %106 = vmatpush1.bf16.msra.mxu0 0
    %107 = vmatprep.subr.bf16.mxu0 0
    %108 = vmatpush1.bf16.msra.mxu0 0
    %109 = vmatprep.subr.bf16.mxu0 0
    %110 = vmatpush1.bf16.msra.mxu0 0
    %111 = vmatprep.subr.bf16.mxu0 0
    %112 = vmatpush1.bf16.msra.mxu0 0
    %113 = vmatprep.subr.bf16.mxu0 0
    %114 = vmatpush1.bf16.msra.mxu0 0
    %115 = vmatprep.subr.bf16.mxu0 0
    %116 = vmatpush1.bf16.msra.mxu0 0
    %117 = vmatprep.subr.bf16.mxu0 0
    %118 = vmatpush1.bf16.msra.mxu0 0
    %119 = vmatprep.subr.bf16.mxu0 0
    %120 = vmatpush1.bf16.msra.mxu0 0
    %121 = vmatprep.subr.bf16.mxu0 0
    %122 = vmatpush1.bf16.msra.mxu0 0
    %123 = vmatprep.subr.bf16.mxu0 0
    %124 = vmatpush1.bf16.msra.mxu0 0
    %125 = vmatprep.mubr.bf16.mxu0 0
    %126 = vmatmul.mubr.bf16.gmra.mrb[0].mxu0 %v91
    %v127 = vpop.f32.mrb[0].mxu0
    %v128 = vadd.f32 %v75, %v127
    %v129 = vpop.f32.mrb[0].mxu0
    %v130 = vpop.f32.mrb[0].mxu0
    %v131 = vadd.f32 %v75, %v130
    %v132 = vpop.f32.mrb[0].mxu0
    %133 = vdwg.mxu0
    %v134 = vmul.f32 %v128, %v128
    %v135 = vmul.f32 %v131, %v131
    %v136 = vmul.f32 %v134, %v128
    %v137 = vmul.f32 %v135, %v131
    %v138 = vmul.f32 %v136, 0.044715
    %v139 = vmul.f32 %v137, 0.044715
    %v140 = vadd.f32 %v128, %v138
    %v141 = vadd.f32 %v131, %v139
    %v142 = vmul.f32 %v140, 1.5957692
    %v143 = vmul.f32 %v141, 1.5957692
    %v144 = vsub.f32 0.0, %v142
    %v145 = vsub.f32 0.0, %v143
    %v146 = vmul.f32 %v144, 1.442695
    %v147 = vpow.pop %v146
    %v148 = vmul.f32 %v145, 1.442695
    %v149 = vpow.pop %v148
    %v150 = vadd.f32 %v147, 1.0
    %v151 = vadd.f32 %v149, 1.0
    %v152 = vrcp.pop %v150
    %v153 = vmul.f32 %v128, %v152
    %v154 = vrcp.pop %v151
    %v155 = vmul.f32 %v131, %v154
    %v156 = vpack.c.bf16 %v155, %v153
    %v157 = vld [vmem:[#allocation8] sm:$0xf]
    %v158 = vld [vmem:[#allocation8 + $0x4] sm:$0xf]
    %v159 = vld [vmem:[#allocation8 + $0x8] sm:$0xf]
    %v160 = vld [vmem:[#allocation8 + $0xc] sm:$0xf]
    %v161 = vld [vmem:[#allocation8 + $0x10] sm:$0xf]
    %v162 = vld [vmem:[#allocation8 + $0x14] sm:$0xf]
    %v163 = vld [vmem:[#allocation8 + $0x18] sm:$0xf]
    %v164 = vld [vmem:[#allocation8 + $0x1c] sm:$0xf]
    %v165 = vld [vmem:[%s4] sm:$0x1]
    %v167 = vlaneseq
    %v168 = vshrl.u32 %v167, 7
    %v169 = vsub.s32 0, %v168
    %v170 = vrot.slane %v165, %v169
    %v180 = vunpack.c.l.b16 %v157
    %v181 = vunpack.c.l.b16 %v158
    %v182 = vunpack.c.l.b16 %v159
    %v183 = vunpack.c.l.b16 %v160
    %v184 = vunpack.c.l.b16 %v161
    %v185 = vunpack.c.l.b16 %v162
    %v186 = vunpack.c.l.b16 %v163
    %v187 = vunpack.c.l.b16 %v164
    %v188 = vpack.c.b16 %v181, %v180
    %v189 = vpack.c.b16 %v183, %v182
    %v190 = vpack.c.b16 %v185, %v184
    %v191 = vpack.c.b16 %v187, %v186
    %vm196 = vcmask 523264
    %v198 = vsel %vm196, %v156, 0
    %200 = vmatprep.subr.bf16.mxu0 0
    %201 = vmatpush1.bf16.msra.mxu0 %v188
    %202 = vmatprep.subr.bf16.mxu0 0
    %203 = vmatpush1.bf16.msra.mxu0 %v189
    %204 = vmatprep.subr.bf16.mxu0 0
    %205 = vmatpush1.bf16.msra.mxu0 %v190
    %206 = vmatprep.subr.bf16.mxu0 0
    %207 = vmatpush1.bf16.msra.mxu0 %v191
    %208 = vmatprep.subr.bf16.mxu0 0
    %209 = vmatpush1.bf16.msra.mxu0 0
    %210 = vmatprep.subr.bf16.mxu0 0
    %211 = vmatpush1.bf16.msra.mxu0 0
    %212 = vmatprep.subr.bf16.mxu0 0
    %213 = vmatpush1.bf16.msra.mxu0 0
    %214 = vmatprep.subr.bf16.mxu0 0
    %215 = vmatpush1.bf16.msra.mxu0 0
    %216 = vmatprep.subr.bf16.mxu0 0
    %217 = vmatpush1.bf16.msra.mxu0 0
    %218 = vmatprep.subr.bf16.mxu0 0
    %219 = vmatpush1.bf16.msra.mxu0 0
    %220 = vmatprep.subr.bf16.mxu0 0
    %221 = vmatpush1.bf16.msra.mxu0 0
    %222 = vmatprep.subr.bf16.mxu0 0
    %223 = vmatpush1.bf16.msra.mxu0 0
    %224 = vmatprep.subr.bf16.mxu0 0
    %225 = vmatpush1.bf16.msra.mxu0 0
    %226 = vmatprep.subr.bf16.mxu0 0
    %227 = vmatpush1.bf16.msra.mxu0 0
    %228 = vmatprep.subr.bf16.mxu0 0
    %229 = vmatpush1.bf16.msra.mxu0 0
    %230 = vmatprep.subr.bf16.mxu0 0
    %231 = vmatpush1.bf16.msra.mxu0 0
    %232 = vmatprep.mubr.bf16.mxu0 0
    %233 = vmatmul.mubr.bf16.gmra.mrb[0].mxu0 %v198
    %v234 = vpop.f32.mrb[0].mxu0
    %v235 = vadd.f32 %v170, %v234
    %v236 = vpop.f32.mrb[0].mxu0
    %v237 = vpop.f32.mrb[0].mxu0
    %v238 = vadd.f32 %v170, %v237
    %v239 = vpop.f32.mrb[0].mxu0
    %240 = vdwg.mxu0
    %241 = vst [vmem:[#allocation9] sm:$0xff] %v235
    %242 = vst [vmem:[#allocation9 + $0x8] sm:$0xff] %v238
    // Predicated region
    $region34: #{tpu_custom_call.1} parent=1 // pred_check
      _
    $region35: #{tpu_custom_call.1} parent=1 // pred_check_branch
      %244 = sbr.rel (0) target = $region37
    $region36: #{tpu_custom_call.1} parent=1 // pred_region
      %s246 = ssub.s32 256, 256
      %247 = vsyncadd [#allocation5], %s246
      %s248 = sshll.u32 [#allocation9], 4
      %s249 = int_to_ptr.vmem [resolvable:$true] %s248
      %254 = dma.vmem_to_hbm [thread:$0]  %s249, 256, %s5, [#allocation5], 128, 128, 8
    $region37: #{tpu_custom_call.1} parent=1 // pred_fallthru
      _
    // Predicated region
    $region38: #{tpu_custom_call.1} parent=1 // pred_check
      _
    $region39: #{tpu_custom_call.1} parent=1 // pred_check_branch
      %256 = sbr.rel (0) target = $region41
    $region40: #{tpu_custom_call.1} parent=1 // pred_region
      %257 = dma.done [#allocation5], 256
    $region41: #{tpu_custom_call.1} parent=1 // pred_fallthru
      _
    %258 = vsyncpa [#allocation4], 1
    %259 = vsyncpa [#allocation7], 1
    %260 = vsyncpa [#allocation5], 1

</llo_original>
